<compile_context>
chip_gen: v5e
topology: v5e:2x2
jax: 0.10.0
libtpu: 0.0.40
codegen_flags: <defaults>
</compile_context>

<pallas_src>
import functools

import jax
import jax.numpy as jnp
from jax.experimental import pallas as pl
from jax.experimental.pallas import tpu as pltpu


def _sublayer_connection_kernel(x_ref, gamma_ref, beta_ref, w_ref, wb_ref,
                                *rest, eps, p, use_dropout):
    if use_dropout:
        noise_ref, o_ref = rest
    else:
        noise_ref = None
        (o_ref,) = rest

    x = x_ref[...].astype(jnp.float32)                      # (TM, D)
    d = x.shape[-1]

    # --- LayerNorm (torch semantics: unbiased std, eps added to std) ---
    mean = jnp.mean(x, axis=-1, keepdims=True)
    centered = x - mean
    var_unbiased = jnp.sum(centered * centered, axis=-1, keepdims=True) * (1.0 / (d - 1))
    std = jnp.sqrt(var_unbiased)
    inv = 1.0 / (std + eps)                                  # one divide per row (TM,1)
    normed = gamma_ref[...] * (centered * inv) + beta_ref[...]

    # --- sublayer: dense projection on the MXU (bf16 in, f32 accumulate) ---
    y = jnp.dot(normed.astype(jnp.bfloat16), w_ref[...],
                preferred_element_type=jnp.float32) + wb_ref[...].astype(jnp.float32)

    # --- dropout (training mode): integer-threshold compare on raw bits ---
    if use_dropout:
        thr = jnp.uint32(min(int(p * (2 ** 32)), 2 ** 32 - 1))
        keep = noise_ref[...] >= thr                         # keep prob = 1 - p
        y = jnp.where(keep, y * (1.0 / (1.0 - p)), 0.0)

    # --- residual: re-read x (cheap vld) instead of holding it across the MXU ---
    o_ref[...] = (x_ref[...].astype(jnp.float32) + y).astype(o_ref.dtype)


def sublayer_connection(x, gamma, beta, w_bf16, wb, *,
                        dropout_p=0.1, training=True, eps=1e-6,
                        noise_bits=None, max_tm=256):
    """x: (M, D) rows of activations. w_bf16: (D, D) bf16. Returns (M, D)."""
    M, D = x.shape
    use_dropout = bool(training) and float(dropout_p) > 0.0
    if use_dropout:
        if noise_bits is None or noise_bits.shape != (M, D):
            raise ValueError("training-mode dropout needs uint32 noise_bits of shape (M, D)")

    # Row tile: full M if it fits, else a 256-row tile (multiple of 8 sublanes,
    # MXU-friendly on v6e/v7x, not oversized for v5e's store bandwidth).
    TM = M if M <= max_tm else max_tm
    grid = (pl.cdiv(M, TM),)

    kernel = functools.partial(_sublayer_connection_kernel,
                               eps=float(eps), p=float(dropout_p),
                               use_dropout=use_dropout)

    in_specs = [
        pl.BlockSpec((TM, D), lambda i: (i, 0)),   # x (tiled over rows)
        pl.BlockSpec((1, D), lambda i: (0, 0)),    # gamma (a_2), resident
        pl.BlockSpec((1, D), lambda i: (0, 0)),    # beta  (b_2), resident
        pl.BlockSpec((D, D), lambda i: (0, 0)),    # sublayer weight (bf16), resident
        pl.BlockSpec((1, D), lambda i: (0, 0)),    # sublayer bias, resident
    ]
    args = [x, gamma, beta, w_bf16, wb]
    if use_dropout:
        in_specs.append(pl.BlockSpec((TM, D), lambda i: (i, 0)))  # dropout bits
        args.append(noise_bits)

    return pl.pallas_call(
        kernel,
        out_shape=jax.ShapeDtypeStruct((M, D), x.dtype),
        grid=grid,
        in_specs=in_specs,
        out_specs=pl.BlockSpec((TM, D), lambda i: (i, 0)),
        compiler_params=pltpu.CompilerParams(
            dimension_semantics=("parallel",),        # shard row tiles across TCs (v7x)
            vmem_limit_bytes=64 * 1024 * 1024,        # sized for v7x's 64 MiB VMEM
        ),
    )(*args)


def _reference(x, gamma, beta, w_bf16, wb, *, dropout_p, training, eps, noise_bits):
    """Pure-JAX reference with identical semantics (incl. bf16 matmul operands)."""
    d = x.shape[-1]
    xf = x.astype(jnp.float32)
    mean = jnp.mean(xf, axis=-1, keepdims=True)
    c = xf - mean
    std = jnp.sqrt(jnp.sum(c * c, axis=-1, keepdims=True) / (d - 1))
    normed = gamma * c / (std + eps) + beta
    y = jnp.dot(normed.astype(jnp.bfloat16), w_bf16,
                preferred_element_type=jnp.float32) + wb
    if training and dropout_p > 0.0:
        thr = jnp.uint32(min(int(dropout_p * (2 ** 32)), 2 ** 32 - 1))
        keep = noise_bits >= thr
        y = jnp.where(keep, y / (1.0 - dropout_p), 0.0)
    return (xf + y).astype(x.dtype)


if __name__ == "__main__":
    key = jax.random.PRNGKey(0)
    B, S, D = 2, 8, 32            # batch=2, seq=8, hidden(size)=32
    kx, kw, kn = jax.random.split(key, 3)

    x = jax.random.normal(kx, (B, S, D), dtype=jnp.float32)

    # LayerNorm params exactly as nn.Parameter init: ones / zeros.
    gamma = jnp.ones((1, D), jnp.float32)
    beta = jnp.zeros((1, D), jnp.float32)

    # Deterministic sublayer (dense D->D), weight shipped as bf16 for the MXU.
    w = (jax.random.normal(kw, (D, D), dtype=jnp.float32) / jnp.sqrt(D)).astype(jnp.bfloat16)
    wb = jnp.zeros((1, D), jnp.float32)

    x2d = x.reshape(B * S, D)

    # Deterministic dropout randomness (uint32 bits, one word per element).
    noise = jax.random.bits(kn, (B * S, D), dtype=jnp.uint32)

    # Eval mode (dropout = identity).
    out_eval = sublayer_connection(x2d, gamma, beta, w, wb,
                                   dropout_p=0.1, training=False)
    jax.block_until_ready(out_eval)
    ref_eval = _reference(x2d, gamma, beta, w, wb,
                          dropout_p=0.1, training=False, eps=1e-6, noise_bits=None)
    assert jnp.allclose(out_eval, ref_eval, atol=2e-2, rtol=2e-2), "eval mismatch"

    # Training mode (dropout with the supplied bits).
    out_train = sublayer_connection(x2d, gamma, beta, w, wb,
                                    dropout_p=0.1, training=True, noise_bits=noise)
    jax.block_until_ready(out_train)
    ref_train = _reference(x2d, gamma, beta, w, wb,
                           dropout_p=0.1, training=True, eps=1e-6, noise_bits=noise)
    assert jnp.allclose(out_train, ref_train, atol=2e-2, rtol=2e-2), "train mismatch"

    _ = out_eval.reshape(B, S, D), out_train.reshape(B, S, D)
    print("KERNEL_OK")
</pallas_src>

<mosaic_0001>
module attributes {stable_mosaic.version = 11 : i64} {
  func.func @_sublayer_connection_kernel(%arg0: i32, %arg1: memref<16x32xf32, #tpu.memory_space<vmem>>, %arg2: memref<1x32xf32, #tpu.memory_space<vmem>>, %arg3: memref<1x32xf32, #tpu.memory_space<vmem>>, %arg4: memref<32x32xbf16, #tpu.memory_space<vmem>>, %arg5: memref<1x32xf32, #tpu.memory_space<vmem>>, %arg6: memref<16x32xf32, #tpu.memory_space<vmem>>) attributes {dimension_semantics = [#tpu.dimension_semantics<parallel>], iteration_bounds = array<i64: 1>, scalar_prefetch = 0 : i64, scratch_operands = 0 : i64, tpu.core_type = #tpu.core_type<tc>, window_params = [{transform_indices = @transform_0, window_bounds = array<i64: 16, 32>}, {pipeline_mode = #tpu.pipeline_mode<synchronous>, transform_indices = @transform_1, window_bounds = array<i64: 1, 32>}, {pipeline_mode = #tpu.pipeline_mode<synchronous>, transform_indices = @transform_2, window_bounds = array<i64: 1, 32>}, {pipeline_mode = #tpu.pipeline_mode<synchronous>, transform_indices = @transform_3, window_bounds = array<i64: 32, 32>}, {pipeline_mode = #tpu.pipeline_mode<synchronous>, transform_indices = @transform_4, window_bounds = array<i64: 1, 32>}, {transform_indices = @transform_5, window_bounds = array<i64: 16, 32>}]} {
    %c0 = arith.constant 0 : index
    %c0_0 = arith.constant 0 : index
    %0 = vector.load %arg1[%c0, %c0_0] : memref<16x32xf32, #tpu.memory_space<vmem>>, vector<16x32xf32>
    %cst = arith.constant dense<0.000000e+00> : vector<16xf32>
    %1 = vector.multi_reduction <add>, %0, %cst [1] : vector<16x32xf32> to vector<16xf32>
    %2 = vector.shape_cast %1 : vector<16xf32> to vector<16x1xf32>
    %cst_1 = arith.constant 3.200000e+01 : f32
    %3 = vector.broadcast %cst_1 : f32 to vector<16x1xf32>
    %4 = arith.divf %2, %3 : vector<16x1xf32>
    %5 = vector.broadcast %4 : vector<16x1xf32> to vector<16x32xf32>
    %6 = arith.subf %0, %5 : vector<16x32xf32>
    %7 = arith.mulf %6, %6 : vector<16x32xf32>
    %cst_2 = arith.constant dense<0.000000e+00> : vector<16xf32>
    %8 = vector.multi_reduction <add>, %7, %cst_2 [1] : vector<16x32xf32> to vector<16xf32>
    %9 = vector.shape_cast %8 : vector<16xf32> to vector<16x1xf32>
    %cst_3 = arith.constant 0.0322580636 : f32
    %10 = vector.broadcast %cst_3 : f32 to vector<16x1xf32>
    %11 = arith.mulf %9, %10 : vector<16x1xf32>
    %12 = math.sqrt %11 : vector<16x1xf32>
    %cst_4 = arith.constant 9.99999997E-7 : f32
    %13 = vector.broadcast %cst_4 : f32 to vector<16x1xf32>
    %14 = arith.addf %12, %13 : vector<16x1xf32>
    %cst_5 = arith.constant 1.000000e+00 : f32
    %15 = vector.broadcast %cst_5 : f32 to vector<16x1xf32>
    %16 = arith.divf %15, %14 : vector<16x1xf32>
    %c0_6 = arith.constant 0 : index
    %c0_7 = arith.constant 0 : index
    %17 = vector.load %arg2[%c0_6, %c0_7] : memref<1x32xf32, #tpu.memory_space<vmem>>, vector<1x32xf32>
    %18 = vector.broadcast %16 : vector<16x1xf32> to vector<16x32xf32>
    %19 = arith.mulf %6, %18 : vector<16x32xf32>
    %20 = vector.broadcast %17 : vector<1x32xf32> to vector<16x32xf32>
    %21 = arith.mulf %20, %19 : vector<16x32xf32>
    %c0_8 = arith.constant 0 : index
    %c0_9 = arith.constant 0 : index
    %22 = vector.load %arg3[%c0_8, %c0_9] : memref<1x32xf32, #tpu.memory_space<vmem>>, vector<1x32xf32>
    %23 = vector.broadcast %22 : vector<1x32xf32> to vector<16x32xf32>
    %24 = arith.addf %21, %23 : vector<16x32xf32>
    %25 = arith.truncf %24 : vector<16x32xf32> to vector<16x32xbf16>
    %c0_10 = arith.constant 0 : index
    %c0_11 = arith.constant 0 : index
    %26 = vector.load %arg4[%c0_10, %c0_11] : memref<32x32xbf16, #tpu.memory_space<vmem>>, vector<32x32xbf16>
    %cst_12 = arith.constant dense<0.000000e+00> : vector<16x32xf32>
    %27 = tpu.matmul %25, %26, %cst_12 {dimension_numbers = #tpu.dot_dimension_numbers<[1], [0], [0], [1], [0, 0, 1, 1], [], []>} : vector<16x32xbf16>, vector<32x32xbf16>, vector<16x32xf32> -> vector<16x32xf32>
    %c0_13 = arith.constant 0 : index
    %c0_14 = arith.constant 0 : index
    %28 = vector.load %arg5[%c0_13, %c0_14] : memref<1x32xf32, #tpu.memory_space<vmem>>, vector<1x32xf32>
    %29 = vector.broadcast %28 : vector<1x32xf32> to vector<16x32xf32>
    %30 = arith.addf %27, %29 : vector<16x32xf32>
    %c0_15 = arith.constant 0 : index
    %c0_16 = arith.constant 0 : index
    %31 = vector.load %arg1[%c0_15, %c0_16] : memref<16x32xf32, #tpu.memory_space<vmem>>, vector<16x32xf32>
    %32 = arith.addf %31, %30 : vector<16x32xf32>
    %c0_17 = arith.constant 0 : index
    %c0_18 = arith.constant 0 : index
    %33 = vector.load %arg6[%c0_17, %c0_18] : memref<16x32xf32, #tpu.memory_space<vmem>>, vector<16x32xf32>
    tpu.vector_store %arg6[%c0_17, %c0_18], %32 {strides = array<i32>} : memref<16x32xf32, #tpu.memory_space<vmem>>, vector<16x32xf32>,
    return
  }
  func.func @transform_0(%arg0: i32) -> (i32, i32) {
    %c0_i32 = arith.constant 0 : i32
    %c0_i32_0 = arith.constant 0 : i32
    return %arg0, %c0_i32 : i32, i32
  }
  func.func @transform_1(%arg0: i32) -> (i32, i32) {
    %c0_i32 = arith.constant 0 : i32
    %c0_i32_0 = arith.constant 0 : i32
    %c0_i32_1 = arith.constant 0 : i32
    return %c0_i32, %c0_i32_0 : i32, i32
  }
  func.func @transform_2(%arg0: i32) -> (i32, i32) {
    %c0_i32 = arith.constant 0 : i32
    %c0_i32_0 = arith.constant 0 : i32
    %c0_i32_1 = arith.constant 0 : i32
    return %c0_i32, %c0_i32_0 : i32, i32
  }
  func.func @transform_3(%arg0: i32) -> (i32, i32) {
    %c0_i32 = arith.constant 0 : i32
    %c0_i32_0 = arith.constant 0 : i32
    %c0_i32_1 = arith.constant 0 : i32
    return %c0_i32, %c0_i32_0 : i32, i32
  }
  func.func @transform_4(%arg0: i32) -> (i32, i32) {
    %c0_i32 = arith.constant 0 : i32
    %c0_i32_0 = arith.constant 0 : i32
    %c0_i32_1 = arith.constant 0 : i32
    return %c0_i32, %c0_i32_0 : i32, i32
  }
  func.func @transform_5(%arg0: i32) -> (i32, i32) {
    %c0_i32 = arith.constant 0 : i32
    %c0_i32_0 = arith.constant 0 : i32
    return %arg0, %c0_i32 : i32, i32
  }
}

</mosaic_0001>

<llo_original>
// kernel: tpu_custom_call.1
$region0: #{tpu_custom_call.1}
  #allocation0 [shape = 'u32[]', space=smem, size = 0x4, offset = 0x4, fixed_abs, tag = 'smem constant byte address 0x4 - core index']
  #allocation1 [shape = 'u32[72,128]{1,0:T(1,128)}', space=vmem, size = 0x9000, scoped, tag = 'internal scratch']
  %s0 = inlined_call_operand.hbm [shape: f32[16,32], index: 0, kind: input, shape index: {}]
  %s1 = inlined_call_operand.hbm [shape: f32[1,32], index: 1, kind: input, shape index: {}]
  %s2 = inlined_call_operand.vmem [shape: f32[1,32], index: 2, kind: input, shape index: {}]
  %s3 = inlined_call_operand.hbm [shape: bf16[32,32], index: 3, kind: input, shape index: {}]
  %s4 = inlined_call_operand.vmem [shape: f32[1,32], index: 4, kind: input, shape index: {}]
  %s5 = inlined_call_operand.hbm [shape: f32[16,32], index: 5, kind: output, shape index: {}]
  %s6 = sld [smem:[#allocation0]]
  $region42: #{tpu_custom_call.1} parent=0
    _
  %s8 = ssub.s32 1, %s6
  %s9 = scalar_select 0, %s8, %s6
  $region1: #{tpu_custom_call.1} parent=0
    #allocation2 [shape = 'u8[8192]{0}', space=vmem, size = 0x2000, scoped, tag = 'input window, operand 0, single buffered']
    #allocation3 [shape = 's32[1]{0}', space=sflag, size = 0x4, scoped, tag = 'scoped memory for tpu_custom_call.1']
    #allocation4 [shape = 's32[1]{0}', space=sflag, size = 0x4, scoped, tag = 'scoped memory for tpu_custom_call.1']
    #allocation5 [shape = 'u8[512]{0}', space=vmem, size = 0x400, scoped, tag = 'input window, operand 1, single buffered']
    #allocation6 [shape = 's32[1]{0}', space=sflag, size = 0x4, scoped, tag = 'scoped memory for tpu_custom_call.1']
    #allocation7 [shape = 'u8[8192]{0}', space=vmem, size = 0x2000, scoped, tag = 'input window, operand 3, single buffered']
    #allocation8 [shape = 'u8[8192]{0}', space=vmem, size = 0x2000, scoped, tag = 'output window, operand 0, single buffered']
    %10 = vsyncpa [#allocation3], 0
    %11 = vsyncpa [#allocation6], 0
    %12 = vsyncpa [#allocation4], 0
    // Predicated region
    $region2: #{tpu_custom_call.1} parent=1 // pred_check
      _
    $region3: #{tpu_custom_call.1} parent=1 // pred_check_branch
      %14 = sbr.rel (0) target = $region5
    $region4: #{tpu_custom_call.1} parent=1 // pred_region
      %16 = vsyncadd [#allocation3], 0
      %s17 = sshll.u32 %s0, 4
      %s18 = int_to_ptr.hbm [resolvable:$true] %s17
      %s19 = sshll.u32 [#allocation2], 4
      %s20 = int_to_ptr.vmem [resolvable:$true] %s19
      %25 = dma.hbm_to_vmem [thread:$0]  %s18, 256, %s20, [#allocation3], 128, 128, 8
    $region5: #{tpu_custom_call.1} parent=1 // pred_fallthru
      _
    // Predicated region
    $region6: #{tpu_custom_call.1} parent=1 // pred_check
      _
    $region7: #{tpu_custom_call.1} parent=1 // pred_check_branch
      %27 = sbr.rel (0) target = $region9
    $region8: #{tpu_custom_call.1} parent=1 // pred_region
      %29 = vsyncadd [#allocation6], 0
      %s31 = sshll.u32 %s1, 4
      %s32 = int_to_ptr.hbm [resolvable:$true] %s31
      %s33 = sshll.u32 [#allocation5], 4
      %s34 = int_to_ptr.vmem [resolvable:$true] %s33
      %36 = dma.hbm_to_vmem [thread:$0]  %s32, 16, %s34, [#allocation6]
    $region9: #{tpu_custom_call.1} parent=1 // pred_fallthru
      _
    // Predicated region
    $region10: #{tpu_custom_call.1} parent=1 // pred_check
      _
    $region11: #{tpu_custom_call.1} parent=1 // pred_check_branch
      %38 = sbr.rel (0) target = $region13
    $region12: #{tpu_custom_call.1} parent=1 // pred_region
      _
    $region13: #{tpu_custom_call.1} parent=1 // pred_fallthru
      _
    // Predicated region
    $region14: #{tpu_custom_call.1} parent=1 // pred_check
      _
    $region15: #{tpu_custom_call.1} parent=1 // pred_check_branch
      %40 = sbr.rel (0) target = $region17
    $region16: #{tpu_custom_call.1} parent=1 // pred_region
      %42 = vsyncadd [#allocation6], 0
      %s43 = sshll.u32 %s3, 4
      %s44 = int_to_ptr.hbm [resolvable:$true] %s43
      %s45 = sshll.u32 [#allocation7], 4
      %s46 = int_to_ptr.vmem [resolvable:$true] %s45
      %51 = dma.hbm_to_vmem [thread:$0]  %s44, 256, %s46, [#allocation6], 64, 64, 4
    $region17: #{tpu_custom_call.1} parent=1 // pred_fallthru
      _
    // Predicated region
    $region18: #{tpu_custom_call.1} parent=1 // pred_check
      _
    $region19: #{tpu_custom_call.1} parent=1 // pred_check_branch
      %53 = sbr.rel (0) target = $region21
    $region20: #{tpu_custom_call.1} parent=1 // pred_region
      _
    $region21: #{tpu_custom_call.1} parent=1 // pred_fallthru
      _
    // Predicated region
    $region22: #{tpu_custom_call.1} parent=1 // pred_check
      _
    $region23: #{tpu_custom_call.1} parent=1 // pred_check_branch
      %55 = sbr.rel (0) target = $region25
    $region24: #{tpu_custom_call.1} parent=1 // pred_region
      %57 = dma.done [#allocation3], 256
    $region25: #{tpu_custom_call.1} parent=1 // pred_fallthru
      _
    // Predicated region
    $region26: #{tpu_custom_call.1} parent=1 // pred_check
      _
    $region27: #{tpu_custom_call.1} parent=1 // pred_check_branch
      %59 = sbr.rel (0) target = $region29
    $region28: #{tpu_custom_call.1} parent=1 // pred_region
      %61 = dma.done [#allocation6], 16
    $region29: #{tpu_custom_call.1} parent=1 // pred_fallthru
      _
    // Predicated region
    $region30: #{tpu_custom_call.1} parent=1 // pred_check
      _
    $region31: #{tpu_custom_call.1} parent=1 // pred_check_branch
      %63 = sbr.rel (0) target = $region33
    $region32: #{tpu_custom_call.1} parent=1 // pred_region
      %65 = dma.done [#allocation6], 256
    $region33: #{tpu_custom_call.1} parent=1 // pred_fallthru
      _
    %v67 = vld [vmem:[#allocation2] sm:$0xff]
    %v68 = vld [vmem:[#allocation2 + $0x8] sm:$0xff]
    %vm69 = vcmask 261120
    %v70 = vsel %vm69, %v67, 0.0
    %71 = vadd.xlane.f32.xlu0 %v70
    %v72 = vpop.xlane.xlu0 %71
    %v73 = vsel %vm69, %v68, 0.0
    %74 = vadd.xlane.f32.xlu0 %v73
    %v75 = vpop.xlane.xlu0 %74
    %v76 = vrcp.pop 32.0
    %v77 = vmul.f32 32.0, %v76
    %v78 = vsub.f32 1.0, %v77
    %v79 = vmul.f32 %v76, %v78
    %v80 = vadd.f32 %v76, %v79
    %vm81 = vweird.f32 %v76
    %v82 = vsel %vm81, %v76, %v80
    %v83 = vmul.f32 %v72, %v82
    %v84 = vmul.f32 %v75, %v82
    %v85 = vsub.f32 %v67, %v83
    %v86 = vsub.f32 %v68, %v84
    %v87 = vmul.f32 %v85, %v85
    %v88 = vmul.f32 %v86, %v86
    %v89 = vsel %vm69, %v87, 0.0
    %90 = vadd.xlane.f32.xlu0 %v89
    %v91 = vpop.xlane.xlu0 %90
    %v92 = vsel %vm69, %v88, 0.0
    %93 = vadd.xlane.f32.xlu0 %v92
    %v94 = vpop.xlane.xlu0 %93
    %v95 = vmul.f32 %v91, 0.032258064
    %v96 = vmul.f32 %v94, 0.032258064
    %v97 = vrsqrt.pop %v95
    %v98 = vmul.f32 %v97, %v95
    %v99 = vmul.f32 %v98, %v97
    %v100 = vmul.f32 0.5, %v99
    %v101 = vsub.f32 1.5, %v100
    %v102 = vmul.f32 %v97, %v101
    %v103 = vmul.f32 %v95, %v102
    %vm104 = vcmp.eq.f32.partialorder %v95, inf
    %v105 = vsel %vm104, %v95, %v103
    %vm106 = vcmp.eq.f32.partialorder %v95, 0.0
    %v107 = vand.u32 %v95, 2147483648
    %v108 = vsel %vm106, %v107, %v105
    %v109 = vrsqrt.pop %v96
    %v110 = vmul.f32 %v109, %v96
    %v111 = vmul.f32 %v110, %v109
    %v112 = vmul.f32 0.5, %v111
    %v113 = vsub.f32 1.5, %v112
    %v114 = vmul.f32 %v109, %v113
    %v115 = vmul.f32 %v96, %v114
    %vm116 = vcmp.eq.f32.partialorder %v96, inf
    %v117 = vsel %vm116, %v96, %v115
    %vm118 = vcmp.eq.f32.partialorder %v96, 0.0
    %v119 = vand.u32 %v96, 2147483648
    %v120 = vsel %vm118, %v119, %v117
    %v121 = vadd.f32 %v108, 1e-06
    %v122 = vadd.f32 %v120, 1e-06
    %v123 = vrcp.pop %v121
    %v124 = vmul.f32 %v121, %v123
    %v125 = vsub.f32 1.0, %v124
    %v126 = vmul.f32 %v123, %v125
    %v127 = vadd.f32 %v123, %v126
    %vm128 = vweird.f32 %v121
    %vm129 = vweird.f32 %v123
    %vm130 = vmor %vm128, %vm129
    %v131 = vsel %vm130, %v123, %v127
    %v132 = vand.u32 2147483647, %v121
    %vm133 = vcmp.eq.f32.partialorder %v132, 8.507059e+37
    %v134 = vand.u32 %v121, 2147483648
    %v135 = vor.u32 1.1754944e-38, %v134
    %v136 = vsel %vm133, %v135, %v131
    %v137 = vmul.f32 1.0, %v136
    %v138 = vrcp.pop %v122
    %v139 = vmul.f32 %v122, %v138
    %v140 = vsub.f32 1.0, %v139
    %v141 = vmul.f32 %v138, %v140
    %v142 = vadd.f32 %v138, %v141
    %vm143 = vweird.f32 %v122
    %vm144 = vweird.f32 %v138
    %vm145 = vmor %vm143, %vm144
    %v146 = vsel %vm145, %v138, %v142
    %v147 = vand.u32 2147483647, %v122
    %vm148 = vcmp.eq.f32.partialorder %v147, 8.507059e+37
    %v149 = vand.u32 %v122, 2147483648
    %v150 = vor.u32 1.1754944e-38, %v149
    %v151 = vsel %vm148, %v150, %v146
    %v152 = vmul.f32 1.0, %v151
    %v153 = vld [vmem:[#allocation5] sm:$0x1]
    %v154 = vmul.f32 %v85, %v137
    %v155 = vmul.f32 %v86, %v152
    %v157 = vperm.slane %v153, 0
    %v159 = vmul.f32 %v157, %v154
    %v160 = vmul.f32 %v157, %v155
    %v161 = vld [vmem:[%s2] sm:$0x1]
    %v163 = vperm.slane %v161, 0
    %v165 = vadd.f32 %v159, %v163
    %v166 = vadd.f32 %v160, %v163
    %v167 = vpack.c.bf16 %v166, %v165
    %v168 = vld [vmem:[#allocation7] sm:$0xf]
    %v169 = vld [vmem:[#allocation7 + $0x4] sm:$0xf]
    %v170 = vld [vmem:[#allocation7 + $0x8] sm:$0xf]
    %v171 = vld [vmem:[#allocation7 + $0xc] sm:$0xf]
    %v172 = vld [vmem:[%s4] sm:$0x1]
    %v174 = vperm.slane %v172, 0
    %v180 = vunpack.c.l.b16 %v168
    %v181 = vunpack.c.l.b16 %v169
    %v182 = vunpack.c.l.b16 %v170
    %v183 = vunpack.c.l.b16 %v171
    %v184 = vpack.c.b16 %v181, %v180
    %v185 = vpack.c.b16 %v183, %v182
    %v189 = vsel %vm69, %v167, 0
    %191 = vmatpush.bf16.msra.mxu0 0
    %192 = vmatpush.bf16.msra.mxu0 0
    %193 = vmatpush.bf16.msra.mxu0 0
    %194 = vmatpush.bf16.msra.mxu0 0
    %195 = vmatpush.bf16.msra.mxu0 0
    %196 = vmatpush.bf16.msra.mxu0 0
    %197 = vmatpush.bf16.msra.mxu0 %v185
    %198 = vmatpush.bf16.msra.mxu0 %v184
    %199 = vmatmul.bf16.gmra.mxu0 %v189
    %v200 = vpop.f32.mrf.mxu0
    %v201 = vadd.f32 %v174, %v200
    %v202 = vpop.f32.mrf.mxu0
    %v203 = vadd.f32 %v174, %v202
    %204 = vdwg.mxu0
    %v205 = vadd.f32 %v67, %v201
    %v206 = vadd.f32 %v68, %v203
    %207 = vst.msk [vmem:[#allocation8] sm:$0xff] %vm69, %v205
    %208 = vst.msk [vmem:[#allocation8 + $0x8] sm:$0xff] %vm69, %v206
    // Predicated region
    $region34: #{tpu_custom_call.1} parent=1 // pred_check
      _
    $region35: #{tpu_custom_call.1} parent=1 // pred_check_branch
      %210 = sbr.rel (0) target = $region37
    $region36: #{tpu_custom_call.1} parent=1 // pred_region
      %212 = vsyncadd [#allocation4], 0
      %s213 = sshll.u32 [#allocation8], 4
      %s214 = int_to_ptr.vmem [resolvable:$true] %s213
      %s215 = sshll.u32 %s5, 4
      %s216 = int_to_ptr.hbm [resolvable:$true] %s215
      %221 = dma.vmem_to_hbm [thread:$0]  %s214, 256, %s216, [#allocation4], 128, 128, 8
    $region37: #{tpu_custom_call.1} parent=1 // pred_fallthru
      _
    // Predicated region
    $region38: #{tpu_custom_call.1} parent=1 // pred_check
      _
    $region39: #{tpu_custom_call.1} parent=1 // pred_check_branch
      %223 = sbr.rel (0) target = $region41
    $region40: #{tpu_custom_call.1} parent=1 // pred_region
      %225 = dma.done [#allocation4], 256
    $region41: #{tpu_custom_call.1} parent=1 // pred_fallthru
      _
    %226 = vsyncpa [#allocation3], 1
    %227 = vsyncpa [#allocation6], 1
    %228 = vsyncpa [#allocation4], 1

</llo_original>
